<compile_context>
chip_gen: v5e
topology: v5e:2x2
jax: 0.10.0
libtpu: 0.0.40
codegen_flags: <defaults>
</compile_context>

<pallas_src>
import numpy as np

import jax
import jax.numpy as jnp
from jax.experimental import pallas as pl
from jax.experimental.pallas import tpu as pltpu

# ----------------------------- model configuration -----------------------------
B, C, H, W = 2, 8, 16, 16
HW = H * W
HEADS, D_H, D_V, D_W = 2, 4, 4, 4
assert D_H == D_V == D_W, "stage-0 dual-axis math requires d_h == d_v == d_w"
ND = HEADS * D_H                 # width of every q/k/v projection (= heads * d)
R = 4
EXP_C = C * R

EPS_LN = 1e-6                    # nn.LayerNorm(eps=1e-6)
EPS_NORM = 1e-12                 # F.normalize default eps

# conv tap t = (dy+1)*3 + (dx+1); flat-token delta of the source pixel
_DELTAS = tuple((t // 3 - 1) * W + (t % 3 - 1) for t in range(9))

# pltpu.roll(x, s, axis): out[i] = x[(i - s) % n]  (jnp.roll semantics) -> the
# tap that reads token (q + delta) needs shift = -delta.  The sign is confirmed
# empirically at startup so the depthwise conv can never be silently mirrored.
_ROLL_SIGN = -1


def _shift_for(t):
    """Static lane-roll amount that brings token (q + delta_t) to position q."""
    return (_ROLL_SIGN * _DELTAS[t]) % HW


def _probe_roll_sign():
    """Run a tiny eager roll kernel once and return the correct shift sign."""
    def kern(x_ref, o_ref):
        o_ref[...] = pltpu.roll(x_ref[...], shift=1, axis=1)

    x = jnp.broadcast_to(jnp.arange(128, dtype=jnp.float32), (8, 128))
    out = pl.pallas_call(kern, out_shape=jax.ShapeDtypeStruct((8, 128), jnp.float32))(x)
    # jnp.roll semantics -> out[0, 0] == x[0, 127] == 127 -> shift = -delta
    return -1 if float(out[0, 0]) == 127.0 else 1


# --------------------- host-built constant geometry arrays ----------------------
def _build_geometry(h, w):
    """Boundary masks for the padded 3x3 depthwise conv taps + pooling matrices."""
    hw = h * w
    q = np.arange(hw)
    qh_, qw_ = q // w, q % w
    masks = np.zeros((9, 1, hw), np.float32)
    for t in range(9):
        dy, dx = t // 3 - 1, t % 3 - 1
        valid = (qh_ + dy >= 0) & (qh_ + dy < h) & (qw_ + dx >= 0) & (qw_ + dx < w)
        masks[t, 0, valid] = 1.0
    pool_h = np.zeros((hw, h), np.float32)
    pool_h[q, qh_] = 1.0 / w             # AdaptiveAvgPool2d((None, 1)): mean over W
    pool_w = np.zeros((hw, w), np.float32)
    pool_w[q, qw_] = 1.0 / h             # AdaptiveAvgPool2d((1, None)): mean over H
    return masks, pool_h, pool_w


_MASKS_NP, _POOL_H_NP, _POOL_W_NP = _build_geometry(H, W)
_MEAN_C_NP = np.full((C, C), 1.0 / C, np.float32)            # LN mean over C channels
_MEAN_E_NP = np.full((EXP_C, EXP_C), 1.0 / EXP_C, np.float32)  # LN mean over EXP_C
_HEAD_MASK_NP = np.kron(np.eye(HEADS, dtype=np.float32),
                        np.ones((D_H, D_H), np.float32))       # block-diag head mask


# ------------------------------ in-kernel helpers -------------------------------
def _ln_cm(x, mean_mat, gamma, beta):
    """LayerNorm over the channel (row) axis of a (channels, tokens) tile.

    The reduction is a matmul against a tiny constant averaging matrix so all
    tensors stay 2D and lane-dense.  Biased variance, eps=1e-6 -> nn.LayerNorm."""
    mu = jnp.dot(mean_mat, x, preferred_element_type=jnp.float32)
    var = jnp.dot(mean_mat, (x - mu) * (x - mu), preferred_element_type=jnp.float32)
    return (x - mu) * jax.lax.rsqrt(var + EPS_LN) * gamma + beta


def _softmax_rows(s):
    s = s - jnp.max(s, axis=-1, keepdims=True)
    e = jnp.exp(s)
    return e / jnp.sum(e, axis=-1, keepdims=True)


# float32 erf (same rational polynomial used by XLA / Eigen) -> exact-GELU that
# lowers with plain mul/add/div only (no dependence on a lax.erf Mosaic rule).
_ERF_ALPHA = (-2.72614225801306e-10, 2.77068142495902e-08, -2.10102402082508e-06,
              -5.69250639462346e-05, -7.34990630326855e-04, -2.95459980854025e-03,
              -1.60960333262415e-02)
_ERF_BETA = (-1.45660718464996e-05, -2.13374055278905e-04, -1.68282697438203e-03,
             -7.37332916720468e-03, -1.42647390514189e-02)


def _erf_f32(x):
    xc = jnp.clip(x, -4.0, 4.0)
    z = xc * xc
    num = _ERF_ALPHA[0] * z + _ERF_ALPHA[1]
    for a in _ERF_ALPHA[2:]:
        num = num * z + a
    den = _ERF_BETA[0] * z + _ERF_BETA[1]
    for b in _ERF_BETA[2:]:
        den = den * z + b
    return xc * num / den


def _gelu_exact(x):
    return 0.5 * x * (1.0 + _erf_f32(x * 0.7071067811865476))


# ------------------- kernel 1: SlayerNorm + Dual_axis (stage 0) -----------------
def _attn_kernel(q_ref, k_ref, v_ref, masks_ref, meanc_ref, gs_ref, bs_ref,
                 ph_ref, pw_ref, dww_ref, dwb_ref, fcw_ref, fcb_ref, hm_ref,
                 fow_ref, fob_ref, out_ref):
    meanc = meanc_ref[...]
    gs, bs = gs_ref[...], bs_ref[...]

    # SlayerNorm (over channels, per token) on q / k / v.
    qn = _ln_cm(q_ref[0], meanc, gs, bs)
    kn = _ln_cm(k_ref[0], meanc, gs, bs)
    vn = _ln_cm(v_ref[0], meanc, gs, bs)

    mrows = [masks_ref[t] for t in range(9)]            # (1, HW) 0/1 boundary masks

    def taps(x):
        # Masked shifted copies of x: tap t holds x[:, token + delta_t] with
        # zero padding at the H/W borders (3x3 depthwise conv, padding=1).
        out = []
        for t in range(9):
            s = _shift_for(t)
            out.append(x if s == 0 else pltpu.roll(x, shift=s, axis=1) * mrows[t])
        return out

    q_taps, k_taps, v_taps = taps(qn), taps(kn), taps(vn)

    def dwconv(tap_list, idx):
        # depthwise 3x3, weights (C, 9) [t = (dy+1)*3+(dx+1)], bias (C, 1)
        w9 = dww_ref[idx]
        acc = dwb_ref[idx]
        for t in range(9):
            acc = acc + w9[:, t:t + 1] * tap_list[t]
        return acc                                      # (C, HW)

    ph, pw = ph_ref[...], pw_ref[...]

    def qk_branch(tap_list, idx, pool):
        conv = dwconv(tap_list, idx)
        pooled = jnp.dot(conv, pool, preferred_element_type=jnp.float32)       # (C, H|W)
        proj = (jnp.dot(fcw_ref[idx], pooled, preferred_element_type=jnp.float32)
                + fcb_ref[idx])                         # (ND, H|W), row = head*d + dd
        # F.normalize(dim=-1): L2 over the spatial axis, eps=1e-12
        nrm = jnp.sqrt(jnp.sum(proj * proj, axis=-1, keepdims=True))
        return proj / jnp.maximum(nrm, EPS_NORM)

    qh = qk_branch(q_taps, 0, ph)        # dwconv_qh / fc_qh on q
    kh = qk_branch(k_taps, 1, ph)        # dwconv_kh / fc_kh on k
    qw = qk_branch(q_taps, 2, pw)        # dwconv_qw / fc_qw on q
    kw = qk_branch(k_taps, 3, pw)        # dwconv_kw / fc_kw on k

    conv_v = dwconv(v_taps, 4)           # dwconv_v on v
    v_t = (jnp.dot(fcw_ref[4], conv_v, preferred_element_type=jnp.float32)
           + fcb_ref[4])                 # (ND, HW): row = head*d_v + dd

    # Both heads at once: cross-head entries are masked to -1e30 so the
    # softmaxes yield an exactly block-diagonal attention matrix (stage 0 has
    # no temperature; attn_drop is identity in eval mode).
    hm = hm_ref[...]
    sh = jnp.dot(qh, kh.T, preferred_element_type=jnp.float32)          # (ND, ND)
    attn_h = _softmax_rows(jnp.where(hm > 0.0, sh, -1e30))
    # attn_w^T directly: column-softmax of (kw @ qw^T).  Entries are cosine
    # similarities in [-1, 1], so the max-shift is unnecessary and the masked
    # entries underflow to exactly 0; the column sum is a ones-row matmul.
    e_wt = jnp.exp(jnp.where(hm > 0.0,
                             jnp.dot(kw, qw.T, preferred_element_type=jnp.float32),
                             -1e30))
    attn_w_t = e_wt / jnp.dot(jnp.ones((1, ND), jnp.float32), e_wt,
                              preferred_element_type=jnp.float32)

    # fc_o(attn_w^T @ attn_h @ v) collapsed into one (C, ND) matrix.
    comb = jnp.dot(fow_ref[...],
                   jnp.dot(attn_w_t, attn_h, preferred_element_type=jnp.float32),
                   preferred_element_type=jnp.float32)                  # (C, ND)
    # out[co, p] == fc_o(result)[p, co]  (lane-dense store; the torch
    # `.view(b, c, h, w)` buffer reinterpretation happens in the wrapper).
    out_ref[0] = jnp.dot(comb, v_t, preferred_element_type=jnp.float32) + fob_ref[...]


# --------------- kernel 2: residual + ElayerNorm + FFN_MultiLN + residual -------
def _ffn_kernel(xpre_ref, attn_ref, masks_ref, mc_ref, me_ref, ge_ref, be_ref,
                w1_ref, b1_ref, dwfw_ref, dwfb_ref, lng_ref, lnb_ref,
                w2_ref, b2_ref, out_ref):
    x1 = xpre_ref[0] + attn_ref[0]                      # residual: v + attention

    xt = _ln_cm(x1, mc_ref[...], ge_ref[...], be_ref[...])                    # ElayerNorm
    h1 = jnp.dot(w1_ref[...], xt, preferred_element_type=jnp.float32) + b1_ref[...]  # (EXP_C, HW)

    # depthwise 3x3 conv on the expanded features (roll + boundary-mask taps)
    w9 = dwfw_ref[...]
    acc = dwfb_ref[...]
    for t in range(9):
        s = _shift_for(t)
        tap = h1 if s == 0 else pltpu.roll(h1, shift=s, axis=1) * masks_ref[t]
        acc = acc + w9[:, t:t + 1] * tap                # (EXP_C, HW)

    me = me_ref[...]
    t1 = _ln_cm(acc + h1, me, lng_ref[0], lnb_ref[0])
    t2 = _ln_cm(t1 + h1, me, lng_ref[1], lnb_ref[1])
    t3 = _ln_cm(t2 + h1, me, lng_ref[2], lnb_ref[2])
    g = _gelu_exact(t3)                                 # exact (erf) GELU

    ffn = jnp.dot(w2_ref[...], g, preferred_element_type=jnp.float32) + b2_ref[...]  # (C, HW)
    out_ref[0] = x1 + ffn


# --------------------------------- parameters -----------------------------------
def init_params(key):
    keys = iter(jax.random.split(key, 32))

    def rnd(shape, scale=0.1):
        return jax.random.normal(next(keys), shape, jnp.float32) * scale

    p = {}
    p["s_ln"] = (jnp.ones((C,), jnp.float32), jnp.zeros((C,), jnp.float32))
    p["e_ln"] = (jnp.ones((C,), jnp.float32), jnp.zeros((C,), jnp.float32))
    for name in ("qh", "kh", "qw", "kw", "v"):
        # depthwise conv weight stored (C, 3, 3) (== torch (C,1,3,3) squeezed)
        p[f"dw_{name}"] = (rnd((C, 3, 3)), rnd((C,), 0.02))
        # linear weights stored (in, out) with y = x @ W + b
        p[f"fc_{name}"] = (rnd((C, ND)), rnd((ND,), 0.02))
    p["fc_o"] = (rnd((ND, C)), rnd((C,), 0.02))
    p["ffn_fc1"] = (rnd((C, EXP_C)), rnd((EXP_C,), 0.02))
    p["ffn_dw"] = (rnd((EXP_C, 3, 3)), rnd((EXP_C,), 0.02))
    for i in (1, 2, 3):
        p[f"ffn_ln{i}"] = (jnp.ones((EXP_C,), jnp.float32), jnp.zeros((EXP_C,), jnp.float32))
    p["ffn_fc2"] = (rnd((EXP_C, C)), rnd((C,), 0.02))
    # NOTE: Dual_axis.Bh / Bw are declared in the PyTorch module but never used
    # in forward() -> intentionally not materialized.
    return p


def pack_params(p):
    """One-time packing of parameters + geometry into the kernel-ready layout
    (hoisted out of the per-call path)."""
    names = ("qh", "kh", "qw", "kw", "v")
    return {
        "masks": jnp.asarray(_MASKS_NP),                   # (9, 1, HW)
        "mean_c": jnp.asarray(_MEAN_C_NP),                 # (C, C)
        "mean_e": jnp.asarray(_MEAN_E_NP),                 # (EXP_C, EXP_C)
        "pool_h": jnp.asarray(_POOL_H_NP),                 # (HW, H)
        "pool_w": jnp.asarray(_POOL_W_NP),                 # (HW, W)
        "head_mask": jnp.asarray(_HEAD_MASK_NP),           # (ND, ND)
        "gS": p["s_ln"][0].reshape(C, 1), "bS": p["s_ln"][1].reshape(C, 1),
        "gE": p["e_ln"][0].reshape(C, 1), "bE": p["e_ln"][1].reshape(C, 1),
        "dw_w": jnp.stack([p[f"dw_{n}"][0].reshape(C, 9) for n in names]),    # (5, C, 9)
        "dw_b": jnp.stack([p[f"dw_{n}"][1].reshape(C, 1) for n in names]),    # (5, C, 1)
        "fc_w": jnp.stack([p[f"fc_{n}"][0].T for n in names]),                # (5, ND, C)
        "fc_b": jnp.stack([p[f"fc_{n}"][1].reshape(ND, 1) for n in names]),   # (5, ND, 1)
        "fo_w": p["fc_o"][0].T,                            # (C, ND)
        "fo_b": p["fc_o"][1].reshape(C, 1),
        "w1": p["ffn_fc1"][0].T,                           # (EXP_C, C)
        "b1": p["ffn_fc1"][1].reshape(EXP_C, 1),
        "dwf_w": p["ffn_dw"][0].reshape(EXP_C, 9),
        "dwf_b": p["ffn_dw"][1].reshape(EXP_C, 1),
        "lng": jnp.stack([p[f"ffn_ln{i}"][0].reshape(EXP_C, 1) for i in (1, 2, 3)]),
        "lnb": jnp.stack([p[f"ffn_ln{i}"][1].reshape(EXP_C, 1) for i in (1, 2, 3)]),
        "w2": p["ffn_fc2"][0].T,                           # (C, EXP_C)
        "b2": p["ffn_fc2"][1].reshape(C, 1),
    }


# ------------------------------- forward (block) --------------------------------
def intra_trans_block(packed, q_nchw, k_nchw, v_nchw):
    b, c, h, w = q_nchw.shape
    hw = h * w

    # NCHW flattened (C, HW) == channels-on-sublanes / tokens-on-lanes layout.
    q_flat = q_nchw.reshape(b, c, hw)
    k_flat = k_nchw.reshape(b, c, hw)
    v_flat = v_nchw.reshape(b, c, hw)

    batch_spec = pl.BlockSpec((1, c, hw), lambda i: (i, 0, 0))

    def const_spec(x):
        nd = x.ndim
        return pl.BlockSpec(x.shape, lambda i, _nd=nd: (0,) * _nd)

    k1_consts = (packed["masks"], packed["mean_c"], packed["gS"], packed["bS"],
                 packed["pool_h"], packed["pool_w"], packed["dw_w"], packed["dw_b"],
                 packed["fc_w"], packed["fc_b"], packed["head_mask"],
                 packed["fo_w"], packed["fo_b"])

    attn_cm = pl.pallas_call(
        _attn_kernel,
        out_shape=jax.ShapeDtypeStruct((b, c, hw), jnp.float32),
        grid=(b,),
        in_specs=[batch_spec, batch_spec, batch_spec] + [const_spec(x) for x in k1_consts],
        out_specs=batch_spec,
        compiler_params=pltpu.CompilerParams(dimension_semantics=("parallel",)),
    )(q_flat, k_flat, v_flat, *k1_consts)

    # torch: fc_o(result).view(b, c, h, w) is a RAW reshape of the (hw, c)-major
    # buffer (not a permute).  attn_cm[b] holds fc_o_out^T, so transpose back to
    # (hw, c) order and reinterpret the buffer as (c, hw) == NCHW-flat.  This is
    # the only op between the two kernels (16 KB total).
    attn_flat = jnp.transpose(attn_cm, (0, 2, 1)).reshape(b, c, hw)

    k2_consts = (packed["masks"], packed["mean_c"], packed["mean_e"],
                 packed["gE"], packed["bE"], packed["w1"], packed["b1"],
                 packed["dwf_w"], packed["dwf_b"], packed["lng"], packed["lnb"],
                 packed["w2"], packed["b2"])

    out_flat = pl.pallas_call(
        _ffn_kernel,
        out_shape=jax.ShapeDtypeStruct((b, c, hw), jnp.float32),
        grid=(b,),
        in_specs=[batch_spec, batch_spec] + [const_spec(x) for x in k2_consts],
        out_specs=batch_spec,
        compiler_params=pltpu.CompilerParams(dimension_semantics=("parallel",)),
    )(v_flat, attn_flat, *k2_consts)

    x = out_flat.reshape(b, c, h, w)
    # stage != 1 and img_size != 7  ->  return (x, x, x)
    return (x, x, x)


if __name__ == "__main__":
    # Pin the pltpu.roll direction once (eager, tiny) before any tracing.
    _ROLL_SIGN = _probe_roll_sign()

    key = jax.random.PRNGKey(0)
    k_params, k_q, k_k, k_v = jax.random.split(key, 4)
    params = init_params(k_params)
    packed = pack_params(params)

    q = jax.random.normal(k_q, (B, C, H, W), jnp.float32)
    k = jax.random.normal(k_k, (B, C, H, W), jnp.float32)
    v = jax.random.normal(k_v, (B, C, H, W), jnp.float32)

    fwd = jax.jit(intra_trans_block)
    out = fwd(packed, q, k, v)
    jax.block_until_ready(out)
    assert out[0].shape == (B, C, H, W)
    print("KERNEL_OK")
</pallas_src>

<mosaic_0001>
module attributes {stable_mosaic.version = 11 : i64} {
  func.func @kern(%arg0: memref<8x128xf32, #tpu.memory_space<vmem>>, %arg1: memref<8x128xf32, #tpu.memory_space<vmem>>) attributes {dimension_semantics = [], scalar_prefetch = 0 : i64, scratch_operands = 0 : i64, tpu.core_type = #tpu.core_type<tc>} {
    %c0 = arith.constant 0 : index
    %c0_0 = arith.constant 0 : index
    %0 = vector.load %arg0[%c0, %c0_0] : memref<8x128xf32, #tpu.memory_space<vmem>>, vector<8x128xf32>
    %c1_i32 = arith.constant 1 : i32
    %1 = tpu.dynamic_rotate %0 by %c1_i32 dim 1 : vector<8x128xf32>, i32 -> vector<8x128xf32>
    %c0_1 = arith.constant 0 : index
    %c0_2 = arith.constant 0 : index
    %2 = vector.load %arg1[%c0_1, %c0_2] : memref<8x128xf32, #tpu.memory_space<vmem>>, vector<8x128xf32>
    tpu.vector_store %arg1[%c0_1, %c0_2], %1 {strides = array<i32>} : memref<8x128xf32, #tpu.memory_space<vmem>>, vector<8x128xf32>,
    return
  }
}

</mosaic_0001>

<llo_original>
// kernel: tpu_custom_call.1
$region0: #{tpu_custom_call.1}
  #allocation0 [shape = 'u32[]', space=smem, size = 0x4, offset = 0x4, fixed_abs, tag = 'smem constant byte address 0x4 - core index']
  #allocation1 [shape = 'u32[72,128]{1,0:T(1,128)}', space=vmem, size = 0x9000, scoped, tag = 'internal scratch']
  %s0 = inlined_call_operand.hbm [shape: f32[8,128], index: 0, kind: input, shape index: {}]
  %s1 = inlined_call_operand.hbm [shape: f32[8,128], index: 1, kind: output, shape index: {}]
  %s2 = sld [smem:[#allocation0]]
  $region18: #{tpu_custom_call.1} parent=0
    _
  %s4 = ssub.s32 1, %s2
  %s5 = scalar_select 0, %s4, %s2
  $region1: #{tpu_custom_call.1} parent=0
    #allocation2 [shape = 'u8[4096]{0}', space=vmem, size = 0x1000, scoped, tag = 'input window, operand 0, single buffered']
    #allocation3 [shape = 's32[1]{0}', space=sflag, size = 0x4, scoped, tag = 'scoped memory for tpu_custom_call.1']
    #allocation4 [shape = 's32[1]{0}', space=sflag, size = 0x4, scoped, tag = 'scoped memory for tpu_custom_call.1']
    #allocation5 [shape = 'u8[4096]{0}', space=vmem, size = 0x1000, scoped, tag = 'output window, operand 0, single buffered']
    %6 = vsyncpa [#allocation3], 0
    %7 = vsyncpa [#allocation4], 0
    // Predicated region
    $region2: #{tpu_custom_call.1} parent=1 // pred_check
      _
    $region3: #{tpu_custom_call.1} parent=1 // pred_check_branch
      %9 = sbr.rel (0) target = $region5
    $region4: #{tpu_custom_call.1} parent=1 // pred_region
      %11 = vsyncadd [#allocation3], 0
      %s13 = sshll.u32 %s0, 4
      %s14 = int_to_ptr.hbm [resolvable:$true] %s13
      %s15 = sshll.u32 [#allocation2], 4
      %s16 = int_to_ptr.vmem [resolvable:$true] %s15
      %18 = dma.hbm_to_vmem [thread:$0]  %s14, 128, %s16, [#allocation3]
    $region5: #{tpu_custom_call.1} parent=1 // pred_fallthru
      _
    // Predicated region
    $region6: #{tpu_custom_call.1} parent=1 // pred_check
      _
    $region7: #{tpu_custom_call.1} parent=1 // pred_check_branch
      %20 = sbr.rel (0) target = $region9
    $region8: #{tpu_custom_call.1} parent=1 // pred_region
      %22 = dma.done [#allocation3], 128
    $region9: #{tpu_custom_call.1} parent=1 // pred_fallthru
      _
    %v23 = vld [vmem:[#allocation2] sm:$0xff]
    %24 = vrot.lane.b32.xlu0 %v23, 1
    %v25 = vpop.permute.xlu0 %24
    %26 = vst [vmem:[#allocation5] sm:$0xff] %v25
    // Predicated region
    $region10: #{tpu_custom_call.1} parent=1 // pred_check
      _
    $region11: #{tpu_custom_call.1} parent=1 // pred_check_branch
      %28 = sbr.rel (0) target = $region13
    $region12: #{tpu_custom_call.1} parent=1 // pred_region
      %30 = vsyncadd [#allocation4], 0
      %s32 = sshll.u32 [#allocation5], 4
      %s33 = int_to_ptr.vmem [resolvable:$true] %s32
      %s34 = sshll.u32 %s1, 4
      %s35 = int_to_ptr.hbm [resolvable:$true] %s34
      %37 = dma.vmem_to_hbm [thread:$0]  %s33, 128, %s35, [#allocation4]
    $region13: #{tpu_custom_call.1} parent=1 // pred_fallthru
      _
    // Predicated region
    $region14: #{tpu_custom_call.1} parent=1 // pred_check
      _
    $region15: #{tpu_custom_call.1} parent=1 // pred_check_branch
      %39 = sbr.rel (0) target = $region17
    $region16: #{tpu_custom_call.1} parent=1 // pred_region
      %41 = dma.done [#allocation4], 128
    $region17: #{tpu_custom_call.1} parent=1 // pred_fallthru
      _
    %42 = vsyncpa [#allocation3], 1
    %43 = vsyncpa [#allocation4], 1

</llo_original>
